<compile_context>
chip_gen: v5e
topology: v5e:2x2
jax: 0.10.0
libtpu: 0.0.40
codegen_flags: <defaults>
</compile_context>

<pallas_src>
import jax
import jax.numpy as jnp
from jax.experimental import pallas as pl
from jax.experimental.pallas import tpu as pltpu

ALPHA = 0.5
BETA = 0.5
EPS = 1e-7


def _make_kernel(s_tile, hw, n_tiles_per_core, exact_cover, acc_rows):
    coef_tp = 1.0 - ALPHA - BETA  # 0.0 for the default ALPHA=BETA=0.5

    def kernel(x_ref, t_ref, out_ref, acc_ref):
        j = pl.program_id(1)

        @pl.when(j == 0)
        def _init():
            acc_ref[...] = jnp.zeros_like(acc_ref)

        x = x_ref[...].astype(jnp.float32)   # (B, C, s_tile, 128)
        t = t_ref[...].astype(jnp.float32)   # (B, C, s_tile, 128)

        # Numerically-stable softmax over the channel axis (leading dim 1).
        m = jnp.max(x, axis=1, keepdims=True)               # (B, 1, s, 128)
        e = jnp.exp(x - m)                                   # (B, C, s, 128)
        inv_den = 1.0 / jnp.sum(e, axis=1, keepdims=True)    # (B, 1, s, 128)
        p = e * inv_den                                      # broadcast mul

        # Batch reductions.  FP = sp - tp, FN = st - tp (folded algebraically);
        # for alpha == beta and coef_tp == 0 the sp/st reductions fuse.
        tp = jnp.sum(p * t, axis=0)                          # (C, s, 128)
        if coef_tp == 0.0 and ALPHA == BETA:
            denom = ALPHA * jnp.sum(p + t, axis=0) + EPS
        else:
            sp = jnp.sum(p, axis=0)
            st = jnp.sum(t, axis=0)
            denom = ALPHA * sp + BETA * st + EPS
            if coef_tp != 0.0:
                denom = denom + coef_tp * tp
        tversky = (tp + EPS) / denom                         # (C, s, 128)

        def accumulate(v):
            # Sublane-aligned VPU adds into the resident vector accumulator;
            # cross-lane collapse is deferred to the finalize step.
            acc_ref[...] = acc_ref[...] + v.reshape(-1, acc_rows, 128).sum(axis=0)

        if exact_cover:
            accumulate(tversky)
        else:
            i = pl.program_id(0) * n_tiles_per_core + j      # logical tile idx
            tile_end = (i + 1) * s_tile * 128

            @pl.when(tile_end <= hw)                         # interior tiles
            def _no_mask():
                accumulate(tversky)

            @pl.when(tile_end > hw)                          # boundary / over-tiles
            def _mask():
                s_idx = jax.lax.broadcasted_iota(jnp.int32, (s_tile, 128), 0)
                l_idx = jax.lax.broadcasted_iota(jnp.int32, (s_tile, 128), 1)
                col = (i * s_tile + s_idx) * 128 + l_idx
                accumulate(jnp.where((col < hw)[None, :, :], tversky, 0.0))

        @pl.when(j == n_tiles_per_core - 1)
        def _finalize():
            # Per-core partial sum as a lane-dense (1, 128) row.
            out_ref[...] = jnp.sum(acc_ref[...], axis=0, keepdims=True)

    return kernel


def multiclass_tversky_loss(inputs, targets, *, s_tile=None, num_cores=2):
    """inputs, targets: (B, C, H, W) arrays (NCHW). Returns scalar f32 loss.

    inputs/targets are consumed in their native dtype (f32/bf16/int one-hot);
    the f32 cast happens inside the kernel to keep HBM traffic minimal.
    """
    B, C, H, W = inputs.shape
    HW = H * W
    x_isz = jnp.dtype(inputs.dtype).itemsize
    t_isz = jnp.dtype(targets.dtype).itemsize

    x = inputs.reshape(B, C, HW)
    t = targets.reshape(B, C, HW)

    # Spatial layout: rows of 128 lanes.  Pad only to the next multiple of 128
    # (free reshape when HW % 128 == 0); row padding is handled by masking.
    s_rows = pl.cdiv(HW, 128)
    hw_pad = s_rows * 128
    if hw_pad != HW:
        x = jnp.pad(x, ((0, 0), (0, 0), (0, hw_pad - HW)))
        t = jnp.pad(t, ((0, 0), (0, 0), (0, hw_pad - HW)))
    x = x.reshape(B, C, s_rows, 128)
    t = t.reshape(B, C, s_rows, 128)

    # Pick s_tile against the real VMEM footprint: 2 inputs x 2 pipeline
    # buffers in the caller dtype + ~6 full-tile f32 temporaries in the body.
    if s_tile is None:
        bytes_per_srow = B * C * 128 * (2 * (x_isz + t_isz) + 6 * 4)
        budget = 12 * 1024 * 1024
        s_tile = max(8, (budget // bytes_per_srow) // 8 * 8)
    if s_tile >= s_rows:
        s_tile = s_rows                      # full dim: any size allowed
    else:
        s_tile = max(8, (s_tile // 8) * 8)   # otherwise multiple of 8

    n_valid = pl.cdiv(s_rows, s_tile)        # spatial tiles actually needed
    num_cores_used = min(num_cores, n_valid)
    npc = pl.cdiv(n_valid, num_cores_used)   # tiles per core
    n_logical = num_cores_used * npc
    exact_cover = (n_logical * s_tile * 128) == HW

    # Clamp over-tiles (if any) to the last valid block; they are fully masked.
    if n_logical == n_valid:
        def in_idx(c, j):
            return (0, 0, c * npc + j, 0)
    else:
        _last = n_valid - 1

        def in_idx(c, j):
            return (0, 0, jnp.minimum(c * npc + j, _last), 0)

    # Largest sublane group dividing the per-tile row count (vector accumulator).
    rows_per_tile = C * s_tile
    acc_rows = next(r for r in (8, 4, 2, 1) if rows_per_tile % r == 0)

    total_cols = C * HW
    kernel = _make_kernel(s_tile, HW, npc, exact_cover, acc_rows)

    n_elems = B * C * hw_pad
    cost = pl.CostEstimate(
        flops=8 * n_elems,
        transcendentals=n_elems,
        bytes_accessed=n_elems * (x_isz + t_isz) + num_cores_used * 128 * 4,
    )

    partial = pl.pallas_call(
        kernel,
        out_shape=jax.ShapeDtypeStruct((num_cores_used, 128), jnp.float32),
        grid_spec=pltpu.PrefetchScalarGridSpec(
            num_scalar_prefetch=0,
            grid=(num_cores_used, npc),
            in_specs=[
                pl.BlockSpec((B, C, s_tile, 128), in_idx),
                pl.BlockSpec((B, C, s_tile, 128), in_idx),
            ],
            out_specs=pl.BlockSpec((1, 128), lambda c, j: (c, 0)),
            scratch_shapes=[pltpu.VMEM((acc_rows, 128), jnp.float32)],
        ),
        compiler_params=pltpu.CompilerParams(
            dimension_semantics=("parallel", "arbitrary"),
            vmem_limit_bytes=32 * 1024 * 1024,
        ),
        cost_estimate=cost,
    )(x, t)

    # Final cross-core / cross-lane collapse is tiny; do it in the wrapper.
    return 1.0 - jnp.sum(partial) / float(total_cols)


def _reference(inputs, targets, epsilon=EPS, alpha=ALPHA, beta=BETA):
    # Pure-JAX reference mirroring the PyTorch forward (vectorized over columns).
    p = jax.nn.softmax(inputs.astype(jnp.float32), axis=1)
    B = inputs.shape[0]
    p = p.reshape(B, -1)
    t = targets.reshape(B, -1).astype(jnp.float32)
    tp = jnp.sum(p * t, axis=0)
    fp = jnp.sum((1 - t) * p, axis=0)
    fn = jnp.sum(t * (1 - p), axis=0)
    tversky = (tp + epsilon) / (tp + alpha * fp + beta * fn + epsilon)
    return 1.0 - jnp.sum(tversky) / tversky.shape[0]


if __name__ == "__main__":
    key = jax.random.PRNGKey(0)
    k1, k2 = jax.random.split(key)

    B, C, H, W = 2, 4, 16, 16
    inputs = jax.random.normal(k1, (B, C, H, W), dtype=jnp.float32)
    labels = jax.random.randint(k2, (B, H, W), 0, C)
    # One-hot targets in NCHW layout (matches the PyTorch usage pattern).
    targets = jnp.transpose(jax.nn.one_hot(labels, C, dtype=jnp.float32),
                            (0, 3, 1, 2))

    loss = multiclass_tversky_loss(inputs, targets)
    jax.block_until_ready(loss)

    ref = _reference(inputs, targets)
    assert jnp.allclose(loss, ref, atol=1e-5, rtol=1e-5), (loss, ref)

    print("KERNEL_OK")
</pallas_src>

<mosaic_0001>
module attributes {stable_mosaic.version = 11 : i64} {
  func.func @kernel(%arg0: i32, %arg1: i32, %arg2: memref<2x4x2x128xf32, #tpu.memory_space<vmem>>, %arg3: memref<2x4x2x128xf32, #tpu.memory_space<vmem>>, %arg4: memref<1x128xf32, #tpu.memory_space<vmem>>, %arg5: memref<8x128xf32, #tpu.memory_space<vmem>>) attributes {dimension_semantics = [#tpu.dimension_semantics<parallel>, #tpu.dimension_semantics<arbitrary>], iteration_bounds = array<i64: 1, 1>, scalar_prefetch = 0 : i64, scratch_operands = 1 : i64, tpu.core_type = #tpu.core_type<tc>, window_params = [{transform_indices = @transform_0, window_bounds = array<i64: 2, 4, 2, 128>}, {transform_indices = @transform_1, window_bounds = array<i64: 2, 4, 2, 128>}, {transform_indices = @transform_2, window_bounds = array<i64: 1, 128>}]} {
    %c0_i32 = arith.constant 0 : i32
    %0 = arith.cmpi eq, %arg1, %c0_i32 : i32
    %1 = arith.extui %0 : i1 to i32
    %c0_i32_0 = arith.constant 0 : i32
    %2 = arith.cmpi ne, %1, %c0_i32_0 : i32
    scf.if %2 {
      %cst_22 = arith.constant 0.000000e+00 : f32
      %35 = vector.broadcast %cst_22 : f32 to vector<8x128xf32>
      %c0_23 = arith.constant 0 : index
      %c0_24 = arith.constant 0 : index
      %36 = vector.load %arg5[%c0_23, %c0_24] : memref<8x128xf32, #tpu.memory_space<vmem>>, vector<8x128xf32>
      tpu.vector_store %arg5[%c0_23, %c0_24], %35 {strides = array<i32>} : memref<8x128xf32, #tpu.memory_space<vmem>>, vector<8x128xf32>,
    } else {
    }
    %c0 = arith.constant 0 : index
    %c0_1 = arith.constant 0 : index
    %c0_2 = arith.constant 0 : index
    %c0_3 = arith.constant 0 : index
    %3 = vector.load %arg2[%c0, %c0_1, %c0_2, %c0_3] : memref<2x4x2x128xf32, #tpu.memory_space<vmem>>, vector<2x4x2x128xf32>
    %c0_4 = arith.constant 0 : index
    %c0_5 = arith.constant 0 : index
    %c0_6 = arith.constant 0 : index
    %c0_7 = arith.constant 0 : index
    %4 = vector.load %arg3[%c0_4, %c0_5, %c0_6, %c0_7] : memref<2x4x2x128xf32, #tpu.memory_space<vmem>>, vector<2x4x2x128xf32>
    %cst = arith.constant dense<0xFF800000> : vector<2x2x128xf32>
    %5 = vector.multi_reduction <maximumf>, %3, %cst [1] : vector<2x4x2x128xf32> to vector<2x2x128xf32>
    %6 = vector.shape_cast %5 : vector<2x2x128xf32> to vector<2x1x2x128xf32>
    %7 = vector.broadcast %6 : vector<2x1x2x128xf32> to vector<2x4x2x128xf32>
    %8 = arith.subf %3, %7 : vector<2x4x2x128xf32>
    %9 = math.exp %8 : vector<2x4x2x128xf32>
    %cst_8 = arith.constant dense<0.000000e+00> : vector<2x2x128xf32>
    %10 = vector.multi_reduction <add>, %9, %cst_8 [1] : vector<2x4x2x128xf32> to vector<2x2x128xf32>
    %11 = vector.shape_cast %10 : vector<2x2x128xf32> to vector<2x1x2x128xf32>
    %cst_9 = arith.constant 1.000000e+00 : f32
    %12 = vector.broadcast %cst_9 : f32 to vector<2x1x2x128xf32>
    %13 = arith.divf %12, %11 : vector<2x1x2x128xf32>
    %14 = vector.broadcast %13 : vector<2x1x2x128xf32> to vector<2x4x2x128xf32>
    %15 = arith.mulf %9, %14 : vector<2x4x2x128xf32>
    %16 = arith.mulf %15, %4 : vector<2x4x2x128xf32>
    %cst_10 = arith.constant dense<0.000000e+00> : vector<4x2x128xf32>
    %17 = vector.multi_reduction <add>, %16, %cst_10 [0] : vector<2x4x2x128xf32> to vector<4x2x128xf32>
    %18 = arith.addf %15, %4 : vector<2x4x2x128xf32>
    %cst_11 = arith.constant dense<0.000000e+00> : vector<4x2x128xf32>
    %19 = vector.multi_reduction <add>, %18, %cst_11 [0] : vector<2x4x2x128xf32> to vector<4x2x128xf32>
    %cst_12 = arith.constant 5.000000e-01 : f32
    %20 = vector.broadcast %cst_12 : f32 to vector<4x2x128xf32>
    %21 = arith.mulf %20, %19 : vector<4x2x128xf32>
    %cst_13 = arith.constant 1.000000e-07 : f32
    %22 = vector.broadcast %cst_13 : f32 to vector<4x2x128xf32>
    %23 = arith.addf %21, %22 : vector<4x2x128xf32>
    %cst_14 = arith.constant 1.000000e-07 : f32
    %24 = vector.broadcast %cst_14 : f32 to vector<4x2x128xf32>
    %25 = arith.addf %17, %24 : vector<4x2x128xf32>
    %26 = arith.divf %25, %23 : vector<4x2x128xf32>
    %c0_15 = arith.constant 0 : index
    %c0_16 = arith.constant 0 : index
    %27 = vector.load %arg5[%c0_15, %c0_16] : memref<8x128xf32, #tpu.memory_space<vmem>>, vector<8x128xf32>
    %28 = vector.shape_cast %26 : vector<4x2x128xf32> to vector<1x8x128xf32>
    %cst_17 = arith.constant dense<0.000000e+00> : vector<8x128xf32>
    %29 = vector.multi_reduction <add>, %28, %cst_17 [0] : vector<1x8x128xf32> to vector<8x128xf32>
    %30 = arith.addf %27, %29 : vector<8x128xf32>
    %c0_18 = arith.constant 0 : index
    %c0_19 = arith.constant 0 : index
    %31 = vector.load %arg5[%c0_18, %c0_19] : memref<8x128xf32, #tpu.memory_space<vmem>>, vector<8x128xf32>
    tpu.vector_store %arg5[%c0_18, %c0_19], %30 {strides = array<i32>} : memref<8x128xf32, #tpu.memory_space<vmem>>, vector<8x128xf32>,
    %c0_i32_20 = arith.constant 0 : i32
    %32 = arith.cmpi eq, %arg1, %c0_i32_20 : i32
    %33 = arith.extui %32 : i1 to i32
    %c0_i32_21 = arith.constant 0 : i32
    %34 = arith.cmpi ne, %33, %c0_i32_21 : i32
    scf.if %34 {
      %c0_22 = arith.constant 0 : index
      %c0_23 = arith.constant 0 : index
      %35 = vector.load %arg5[%c0_22, %c0_23] : memref<8x128xf32, #tpu.memory_space<vmem>>, vector<8x128xf32>
      %cst_24 = arith.constant dense<0.000000e+00> : vector<128xf32>
      %36 = vector.multi_reduction <add>, %35, %cst_24 [0] : vector<8x128xf32> to vector<128xf32>
      %37 = vector.shape_cast %36 : vector<128xf32> to vector<1x128xf32>
      %c0_25 = arith.constant 0 : index
      %c0_26 = arith.constant 0 : index
      %38 = vector.load %arg4[%c0_25, %c0_26] : memref<1x128xf32, #tpu.memory_space<vmem>>, vector<1x128xf32>
      tpu.vector_store %arg4[%c0_25, %c0_26], %37 {strides = array<i32>} : memref<1x128xf32, #tpu.memory_space<vmem>>, vector<1x128xf32>,
    } else {
    }
    return
  }
  func.func @transform_0(%arg0: i32, %arg1: i32) -> (i32, i32, i32, i32) {
    %c1_i32 = arith.constant 1 : i32
    %0 = arith.muli %arg0, %c1_i32 : i32
    %1 = arith.addi %0, %arg1 : i32
    %c0_i32 = arith.constant 0 : i32
    %c0_i32_0 = arith.constant 0 : i32
    %c0_i32_1 = arith.constant 0 : i32
    %c0_i32_2 = arith.constant 0 : i32
    return %c0_i32, %c0_i32_0, %1, %c0_i32_1 : i32, i32, i32, i32
  }
  func.func @transform_1(%arg0: i32, %arg1: i32) -> (i32, i32, i32, i32) {
    %c1_i32 = arith.constant 1 : i32
    %0 = arith.muli %arg0, %c1_i32 : i32
    %1 = arith.addi %0, %arg1 : i32
    %c0_i32 = arith.constant 0 : i32
    %c0_i32_0 = arith.constant 0 : i32
    %c0_i32_1 = arith.constant 0 : i32
    %c0_i32_2 = arith.constant 0 : i32
    return %c0_i32, %c0_i32_0, %1, %c0_i32_1 : i32, i32, i32, i32
  }
  func.func @transform_2(%arg0: i32, %arg1: i32) -> (i32, i32) {
    %c0_i32 = arith.constant 0 : i32
    %c0_i32_0 = arith.constant 0 : i32
    return %arg0, %c0_i32 : i32, i32
  }
}

</mosaic_0001>

<llo_original>
// kernel: tpu_custom_call.1
$region0: #{tpu_custom_call.1}
  #allocation0 [shape = 'u32[]', space=smem, size = 0x4, offset = 0x4, fixed_abs, tag = 'smem constant byte address 0x4 - core index']
  #allocation1 [shape = 'u32[72,128]{1,0:T(1,128)}', space=vmem, size = 0x9000, scoped, tag = 'internal scratch']
  #allocation2 [shape = 'f32[8,128]{1,0:T(8,128)}', space=vmem, size = 0x1000, scoped, tag = 'scratch operand']
  %s0 = inlined_call_operand.hbm [shape: f32[2,4,2,128], index: 0, kind: input, shape index: {}]
  %s1 = inlined_call_operand.hbm [shape: f32[2,4,2,128], index: 1, kind: input, shape index: {}]
  %s2 = inlined_call_operand.hbm [shape: f32[1,128], index: 2, kind: output, shape index: {}]
  %s3 = sld [smem:[#allocation0]]
  $region34: #{tpu_custom_call.1} parent=0
    _
  %s5 = ssub.s32 1, %s3
  %s6 = scalar_select 0, %s5, %s3
  $region1: #{tpu_custom_call.1} parent=0
    #allocation3 [shape = 'u8[8192]{0}', space=vmem, size = 0x2000, scoped, tag = 'input window, operand 0, single buffered']
    #allocation4 [shape = 's32[1]{0}', space=sflag, size = 0x4, scoped, tag = 'scoped memory for tpu_custom_call.1']
    #allocation5 [shape = 's32[1]{0}', space=sflag, size = 0x4, scoped, tag = 'scoped memory for tpu_custom_call.1']
    #allocation6 [shape = 'u8[8192]{0}', space=vmem, size = 0x2000, scoped, tag = 'input window, operand 1, single buffered']
    #allocation7 [shape = 's32[1]{0}', space=sflag, size = 0x4, scoped, tag = 'scoped memory for tpu_custom_call.1']
    #allocation8 [shape = 'u8[512]{0}', space=vmem, size = 0x400, scoped, tag = 'output window, operand 0, single buffered']
    %7 = vsyncpa [#allocation4], 0
    %8 = vsyncpa [#allocation7], 0
    %9 = vsyncpa [#allocation5], 0
    // Predicated region
    $region2: #{tpu_custom_call.1} parent=1 // pred_check
      _
    $region3: #{tpu_custom_call.1} parent=1 // pred_check_branch
      %11 = sbr.rel (0) target = $region5
    $region4: #{tpu_custom_call.1} parent=1 // pred_region
      %s12 = sadd.s32 0, 0
      %14 = vsyncadd [#allocation4], 0
      %s15 = smul.addr %s12, 2
      %s16 = scalar_lea.hbm %s0, %s15
      %s17 = sshll.u32 %s16, 4
      %s18 = int_to_ptr.hbm [resolvable:$true] %s17
      %s19 = sshll.u32 [#allocation3], 4
      %s20 = int_to_ptr.vmem [resolvable:$true] %s19
      %25 = dma.hbm_to_vmem [thread:$0]  %s18, 256, %s20, [#allocation4], 32, 32, 2
    $region5: #{tpu_custom_call.1} parent=1 // pred_fallthru
      _
    // Predicated region
    $region6: #{tpu_custom_call.1} parent=1 // pred_check
      _
    $region7: #{tpu_custom_call.1} parent=1 // pred_check_branch
      %27 = sbr.rel (0) target = $region9
    $region8: #{tpu_custom_call.1} parent=1 // pred_region
      %s28 = sadd.s32 0, 0
      %30 = vsyncadd [#allocation7], 0
      %s31 = smul.addr %s28, 2
      %s32 = scalar_lea.hbm %s1, %s31
      %s33 = sshll.u32 %s32, 4
      %s34 = int_to_ptr.hbm [resolvable:$true] %s33
      %s35 = sshll.u32 [#allocation6], 4
      %s36 = int_to_ptr.vmem [resolvable:$true] %s35
      %41 = dma.hbm_to_vmem [thread:$0]  %s34, 256, %s36, [#allocation7], 32, 32, 2
    $region9: #{tpu_custom_call.1} parent=1 // pred_fallthru
      _
    // Predicated region
    $region10: #{tpu_custom_call.1} parent=1 // pred_check
      _
    $region11: #{tpu_custom_call.1} parent=1 // pred_check_branch
      %43 = sbr.rel (0) target = $region13
    $region12: #{tpu_custom_call.1} parent=1 // pred_region
      %45 = dma.done [#allocation4], 256
    $region13: #{tpu_custom_call.1} parent=1 // pred_fallthru
      _
    // Predicated region
    $region14: #{tpu_custom_call.1} parent=1 // pred_check
      _
    $region15: #{tpu_custom_call.1} parent=1 // pred_check_branch
      %47 = sbr.rel (0) target = $region17
    $region16: #{tpu_custom_call.1} parent=1 // pred_region
      %49 = dma.done [#allocation7], 256
    $region17: #{tpu_custom_call.1} parent=1 // pred_fallthru
      _
    %s50 = sadd.s32 0, 0
    %s51 = sadd.s32 0, 0
    %p52 = scmp.eq.s32.totalorder 0, 0
    // Predicated region
    $region18: #{tpu_custom_call.1} parent=1 // pred_check
      %p53 = pneg %p52
    $region19: #{tpu_custom_call.1} parent=1 // pred_check_branch
      %55 = sbr.rel (%p53) target = $region21
    $region20: #{tpu_custom_call.1} parent=1 // pred_region
      %56 = vst [vmem:[#allocation2] sm:$0xff] 0.0
    $region21: #{tpu_custom_call.1} parent=1 // pred_fallthru
      _
    %v57 = vld [vmem:[#allocation3] sm:$0x3]
    %v58 = vld [vmem:[#allocation3 + $0x2] sm:$0x3]
    %v59 = vld [vmem:[#allocation3 + $0x4] sm:$0x3]
    %v60 = vld [vmem:[#allocation3 + $0x6] sm:$0x3]
    %v61 = vld [vmem:[#allocation3 + $0x8] sm:$0x3]
    %v62 = vld [vmem:[#allocation3 + $0xa] sm:$0x3]
    %v63 = vld [vmem:[#allocation3 + $0xc] sm:$0x3]
    %v64 = vld [vmem:[#allocation3 + $0xe] sm:$0x3]
    %v65 = vld [vmem:[#allocation6] sm:$0x3]
    %v66 = vld [vmem:[#allocation6 + $0x2] sm:$0x3]
    %v67 = vld [vmem:[#allocation6 + $0x4] sm:$0x3]
    %v68 = vld [vmem:[#allocation6 + $0x6] sm:$0x3]
    %v69 = vld [vmem:[#allocation6 + $0x8] sm:$0x3]
    %v70 = vld [vmem:[#allocation6 + $0xa] sm:$0x3]
    %v71 = vld [vmem:[#allocation6 + $0xc] sm:$0x3]
    %v72 = vld [vmem:[#allocation6 + $0xe] sm:$0x3]
    %vm73 = vcmask 1041408
    %v74 = vsel %vm73, %v57, -inf
    %v75 = vsel %vm73, %v58, -inf
    %v76 = vsel %vm73, %v59, -inf
    %v77 = vmax.f32 %v74, %v76
    %v78 = vsel %vm73, %v60, -inf
    %v79 = vmax.f32 %v75, %v78
    %v80 = vmax.f32 %v77, %v79
    %v81 = vsel %vm73, %v61, -inf
    %v82 = vsel %vm73, %v62, -inf
    %v83 = vsel %vm73, %v63, -inf
    %v84 = vmax.f32 %v81, %v83
    %v85 = vsel %vm73, %v64, -inf
    %v86 = vmax.f32 %v82, %v85
    %v87 = vmax.f32 %v84, %v86
    %v88 = vsub.f32 %v57, %v80
    %v89 = vsub.f32 %v58, %v80
    %v90 = vsub.f32 %v59, %v80
    %v91 = vsub.f32 %v60, %v80
    %v92 = vsub.f32 %v61, %v87
    %v93 = vsub.f32 %v62, %v87
    %v94 = vsub.f32 %v63, %v87
    %v95 = vsub.f32 %v64, %v87
    %v96 = vmul.f32 %v88, 1.442695
    %v97 = vpow.pop %v96
    %v98 = vmul.f32 %v89, 1.442695
    %v99 = vpow.pop %v98
    %v100 = vmul.f32 %v90, 1.442695
    %v101 = vpow.pop %v100
    %v102 = vmul.f32 %v91, 1.442695
    %v103 = vpow.pop %v102
    %v104 = vmul.f32 %v92, 1.442695
    %v105 = vpow.pop %v104
    %v106 = vmul.f32 %v93, 1.442695
    %v107 = vpow.pop %v106
    %v108 = vmul.f32 %v94, 1.442695
    %v109 = vpow.pop %v108
    %v110 = vmul.f32 %v95, 1.442695
    %v111 = vpow.pop %v110
    %v112 = vsel %vm73, %v97, 0.0
    %v113 = vsel %vm73, %v99, 0.0
    %v114 = vadd.f32 %v112, %v113
    %v115 = vsel %vm73, %v101, 0.0
    %v116 = vadd.f32 %v114, %v115
    %v117 = vsel %vm73, %v103, 0.0
    %v118 = vadd.f32 %v116, %v117
    %v119 = vsel %vm73, %v105, 0.0
    %v120 = vsel %vm73, %v107, 0.0
    %v121 = vadd.f32 %v119, %v120
    %v122 = vsel %vm73, %v109, 0.0
    %v123 = vadd.f32 %v121, %v122
    %v124 = vsel %vm73, %v111, 0.0
    %v125 = vadd.f32 %v123, %v124
    %v126 = vrcp.pop %v118
    %v127 = vmul.f32 %v118, %v126
    %v128 = vsub.f32 1.0, %v127
    %v129 = vmul.f32 %v126, %v128
    %v130 = vadd.f32 %v126, %v129
    %vm131 = vweird.f32 %v118
    %vm132 = vweird.f32 %v126
    %vm133 = vmor %vm131, %vm132
    %v134 = vsel %vm133, %v126, %v130
    %v135 = vand.u32 2147483647, %v118
    %vm136 = vcmp.eq.f32.partialorder %v135, 8.507059e+37
    %v137 = vand.u32 %v118, 2147483648
    %v138 = vor.u32 1.1754944e-38, %v137
    %v139 = vsel %vm136, %v138, %v134
    %v140 = vmul.f32 1.0, %v139
    %v141 = vrcp.pop %v125
    %v142 = vmul.f32 %v125, %v141
    %v143 = vsub.f32 1.0, %v142
    %v144 = vmul.f32 %v141, %v143
    %v145 = vadd.f32 %v141, %v144
    %vm146 = vweird.f32 %v125
    %vm147 = vweird.f32 %v141
    %vm148 = vmor %vm146, %vm147
    %v149 = vsel %vm148, %v141, %v145
    %v150 = vand.u32 2147483647, %v125
    %vm151 = vcmp.eq.f32.partialorder %v150, 8.507059e+37
    %v152 = vand.u32 %v125, 2147483648
    %v153 = vor.u32 1.1754944e-38, %v152
    %v154 = vsel %vm151, %v153, %v149
    %v155 = vmul.f32 1.0, %v154
    %v156 = vmul.f32 %v97, %v140
    %v157 = vmul.f32 %v99, %v140
    %v158 = vmul.f32 %v101, %v140
    %v159 = vmul.f32 %v103, %v140
    %v160 = vmul.f32 %v105, %v155
    %v161 = vmul.f32 %v107, %v155
    %v162 = vmul.f32 %v109, %v155
    %v163 = vmul.f32 %v111, %v155
    %v164 = vmul.f32 %v156, %v65
    %v165 = vmul.f32 %v157, %v66
    %v166 = vmul.f32 %v158, %v67
    %v167 = vmul.f32 %v159, %v68
    %v168 = vmul.f32 %v160, %v69
    %v169 = vmul.f32 %v161, %v70
    %v170 = vmul.f32 %v162, %v71
    %v171 = vmul.f32 %v163, %v72
    %v172 = vsel %vm73, %v164, 0.0
    %v173 = vsel %vm73, %v168, 0.0
    %v174 = vadd.f32 %v172, %v173
    %v175 = vsel %vm73, %v165, 0.0
    %v176 = vsel %vm73, %v169, 0.0
    %v177 = vadd.f32 %v175, %v176
    %v178 = vsel %vm73, %v166, 0.0
    %v179 = vsel %vm73, %v170, 0.0
    %v180 = vadd.f32 %v178, %v179
    %v181 = vsel %vm73, %v167, 0.0
    %v182 = vsel %vm73, %v171, 0.0
    %v183 = vadd.f32 %v181, %v182
    %v184 = vadd.f32 %v156, %v65
    %v185 = vadd.f32 %v157, %v66
    %v186 = vadd.f32 %v158, %v67
    %v187 = vadd.f32 %v159, %v68
    %v188 = vadd.f32 %v160, %v69
    %v189 = vadd.f32 %v161, %v70
    %v190 = vadd.f32 %v162, %v71
    %v191 = vadd.f32 %v163, %v72
    %v192 = vsel %vm73, %v184, 0.0
    %v193 = vsel %vm73, %v188, 0.0
    %v194 = vadd.f32 %v192, %v193
    %v195 = vsel %vm73, %v185, 0.0
    %v196 = vsel %vm73, %v189, 0.0
    %v197 = vadd.f32 %v195, %v196
    %v198 = vsel %vm73, %v186, 0.0
    %v199 = vsel %vm73, %v190, 0.0
    %v200 = vadd.f32 %v198, %v199
    %v201 = vsel %vm73, %v187, 0.0
    %v202 = vsel %vm73, %v191, 0.0
    %v203 = vadd.f32 %v201, %v202
    %v204 = vmul.f32 %v194, 0.5
    %v205 = vmul.f32 %v197, 0.5
    %v206 = vmul.f32 %v200, 0.5
    %v207 = vmul.f32 %v203, 0.5
    %v208 = vadd.f32 %v204, 1e-07
    %v209 = vadd.f32 %v205, 1e-07
    %v210 = vadd.f32 %v206, 1e-07
    %v211 = vadd.f32 %v207, 1e-07
    %v212 = vadd.f32 %v174, 1e-07
    %v213 = vadd.f32 %v177, 1e-07
    %v214 = vadd.f32 %v180, 1e-07
    %v215 = vadd.f32 %v183, 1e-07
    %v216 = vrcp.pop %v208
    %v217 = vmul.f32 %v208, %v216
    %v218 = vsub.f32 1.0, %v217
    %v219 = vmul.f32 %v216, %v218
    %v220 = vadd.f32 %v216, %v219
    %vm221 = vweird.f32 %v208
    %vm222 = vweird.f32 %v216
    %vm223 = vmor %vm221, %vm222
    %v224 = vsel %vm223, %v216, %v220
    %v225 = vand.u32 2147483647, %v208
    %vm226 = vcmp.eq.f32.partialorder %v225, 8.507059e+37
    %v227 = vand.u32 %v208, 2147483648
    %v228 = vor.u32 1.1754944e-38, %v227
    %v229 = vsel %vm226, %v228, %v224
    %v230 = vmul.f32 %v212, %v229
    %v231 = vrcp.pop %v209
    %v232 = vmul.f32 %v209, %v231
    %v233 = vsub.f32 1.0, %v232
    %v234 = vmul.f32 %v231, %v233
    %v235 = vadd.f32 %v231, %v234
    %vm236 = vweird.f32 %v209
    %vm237 = vweird.f32 %v231
    %vm238 = vmor %vm236, %vm237
    %v239 = vsel %vm238, %v231, %v235
    %v240 = vand.u32 2147483647, %v209
    %vm241 = vcmp.eq.f32.partialorder %v240, 8.507059e+37
    %v242 = vand.u32 %v209, 2147483648
    %v243 = vor.u32 1.1754944e-38, %v242
    %v244 = vsel %vm241, %v243, %v239
    %v245 = vmul.f32 %v213, %v244
    %v246 = vrcp.pop %v210
    %v247 = vmul.f32 %v210, %v246
    %v248 = vsub.f32 1.0, %v247
    %v249 = vmul.f32 %v246, %v248
    %v250 = vadd.f32 %v246, %v249
    %vm251 = vweird.f32 %v210
    %vm252 = vweird.f32 %v246
    %vm253 = vmor %vm251, %vm252
    %v254 = vsel %vm253, %v246, %v250
    %v255 = vand.u32 2147483647, %v210
    %vm256 = vcmp.eq.f32.partialorder %v255, 8.507059e+37
    %v257 = vand.u32 %v210, 2147483648
    %v258 = vor.u32 1.1754944e-38, %v257
    %v259 = vsel %vm256, %v258, %v254
    %v260 = vmul.f32 %v214, %v259
    %v261 = vrcp.pop %v211
    %v262 = vmul.f32 %v211, %v261
    %v263 = vsub.f32 1.0, %v262
    %v264 = vmul.f32 %v261, %v263
    %v265 = vadd.f32 %v261, %v264
    %vm266 = vweird.f32 %v211
    %vm267 = vweird.f32 %v261
    %vm268 = vmor %vm266, %vm267
    %v269 = vsel %vm268, %v261, %v265
    %v270 = vand.u32 2147483647, %v211
    %vm271 = vcmp.eq.f32.partialorder %v270, 8.507059e+37
    %v272 = vand.u32 %v211, 2147483648
    %v273 = vor.u32 1.1754944e-38, %v272
    %v274 = vsel %vm271, %v273, %v269
    %v275 = vmul.f32 %v215, %v274
    %v276 = vld [vmem:[#allocation2] sm:$0xff]
    %v277 = vadd.f32 %v230, 0.0
    %v278 = vadd.f32 %v245, 0.0
    %v279 = vadd.f32 %v260, 0.0
    %v280 = vadd.f32 %v275, 0.0
    %285 = vst [vmem:[#allocation1] ss:$4 sm:$0xff] %v277
    %s286 = scalar_lea.vmem [#allocation1], 1
    %287 = vst [vmem:[%s286] ss:$4 sm:$0xff] %v278
    %s288 = scalar_lea.vmem [#allocation1], 2
    %289 = vst [vmem:[%s288] ss:$4 sm:$0xff] %v279
    %s290 = scalar_lea.vmem [#allocation1], 3
    %291 = vst [vmem:[%s290] ss:$4 sm:$0xff] %v280
    %v292 = vld.sshfl [vmem:[#allocation1] sm:$0xff pattern:$0x73625140]
    %v294 = vadd.f32 %v276, %v292
    %295 = vst [vmem:[#allocation2] sm:$0xff] %v294
    // Predicated region
    $region22: #{tpu_custom_call.1} parent=1 // pred_check
      %p296 = pneg %p52
    $region23: #{tpu_custom_call.1} parent=1 // pred_check_branch
      %298 = sbr.rel (%p296) target = $region25
    $region24: #{tpu_custom_call.1} parent=1 // pred_region
      %v299 = vld [vmem:[#allocation2] sm:$0xff]
      %v300 = vrot.slane %v299, 4
      %v301 = vadd.f32 %v299, %v300
      %v302 = vrot.slane %v301, 2
      %v303 = vadd.f32 %v301, %v302
      %v304 = vrot.slane %v303, 1
      %v305 = vadd.f32 %v303, %v304
      %306 = vst [vmem:[#allocation8] sm:$0x1] %v305
    $region25: #{tpu_custom_call.1} parent=1 // pred_fallthru
      _
    // Predicated region
    $region26: #{tpu_custom_call.1} parent=1 // pred_check
      _
    $region27: #{tpu_custom_call.1} parent=1 // pred_check_branch
      %308 = sbr.rel (0) target = $region29
    $region28: #{tpu_custom_call.1} parent=1 // pred_region
      %310 = vsyncadd [#allocation5], 0
      %s312 = sshll.u32 [#allocation8], 4
      %s313 = int_to_ptr.vmem [resolvable:$true] %s312
      %s314 = sshll.u32 %s2, 4
      %s315 = int_to_ptr.hbm [resolvable:$true] %s314
      %317 = dma.vmem_to_hbm [thread:$0]  %s313, 16, %s315, [#allocation5]
    $region29: #{tpu_custom_call.1} parent=1 // pred_fallthru
      _
    // Predicated region
    $region30: #{tpu_custom_call.1} parent=1 // pred_check
      _
    $region31: #{tpu_custom_call.1} parent=1 // pred_check_branch
      %319 = sbr.rel (0) target = $region33
    $region32: #{tpu_custom_call.1} parent=1 // pred_region
      %321 = dma.done [#allocation5], 16
    $region33: #{tpu_custom_call.1} parent=1 // pred_fallthru
      _
    %322 = vsyncpa [#allocation4], 1
    %323 = vsyncpa [#allocation7], 1
    %324 = vsyncpa [#allocation5], 1

</llo_original>
